<compile_context>
chip_gen: v7x
topology: tpu7x:2x2x1
jax: 0.10.0
libtpu: 0.0.40
codegen_flags: <defaults>
</compile_context>

<pallas_src>
import jax
import jax.numpy as jnp
from jax.experimental import pallas as pl
from jax.experimental.pallas import tpu as pltpu

# Hyperparameters implied by the module (opt.*): chosen small & deterministic.
LATENT_DIM = 16            # opt.latent_dim
LABEL_DIM = 16             # opt.label_dim
SP_SIZE = 32               # opt.sp_size
HID1 = LATENT_DIM * 2      # first hidden width
BATCH = 8

_SELU_ALPHA = 1.6732632423543772
_SELU_SCALE = 1.0507009873554804


def _round_up(x, m):
    return (x + m - 1) // m * m


def _selu_core(v):
    # SELU without the outer scale (the scale is folded into the consumer weights).
    return jnp.where(v > 0, v, _SELU_ALPHA * (jnp.exp(v) - 1.0))


def generator_kernel(label_ref, noise_ref,
                     w1a_ref, w1b_ref, b1_ref,
                     w2_ref, b2_ref,
                     w3_ref, b3_ref,
                     w4_ref, b4_ref,
                     o_ref):
    # Layer 1: split-K pair of dots replaces cat([label, noise], -1) @ W1
    # (avoids the cross-lane concat; both dots accumulate in f32 on the MXU).
    h = (jnp.dot(label_ref[...], w1a_ref[...], preferred_element_type=jnp.float32)
         + jnp.dot(noise_ref[...], w1b_ref[...], preferred_element_type=jnp.float32)
         + b1_ref[...])
    h = _selu_core(h)                                   # f32 elementwise (v5e-safe)
    h = jnp.dot(h.astype(w2_ref.dtype), w2_ref[...],
                preferred_element_type=jnp.float32) + b2_ref[...]
    h = _selu_core(h)
    h = jnp.dot(h.astype(w3_ref.dtype), w3_ref[...],
                preferred_element_type=jnp.float32) + b3_ref[...]
    h = _selu_core(h)
    # Layer 4: unpadded (tb, SP_SIZE) store — block last dim equals the full
    # array dim, so it's a single contiguous DMA per tile.
    o_ref[...] = (jnp.dot(h.astype(w4_ref.dtype), w4_ref[...],
                          preferred_element_type=jnp.float32)
                  + b4_ref[...]).astype(o_ref.dtype)


def prepare_params(params, compute_dtype=jnp.bfloat16):
    """One-time parameter prep (run once, not per forward call)."""
    (w1, b1), (w2, b2), (w3, b3), (w4, b4) = params
    # Split W1 along K (label rows first, matching torch.cat((label, noise), -1)).
    w1a = w1[:LABEL_DIM].astype(compute_dtype)
    w1b = w1[LABEL_DIM:].astype(compute_dtype)
    # Fold the SELU scale of the producing activation into the consuming weights.
    w2s = (w2 * _SELU_SCALE).astype(compute_dtype)
    w3s = (w3 * _SELU_SCALE).astype(compute_dtype)
    w4s = (w4 * _SELU_SCALE).astype(compute_dtype)
    return (w1a, w1b, b1.astype(jnp.float32),
            w2s, b2.astype(jnp.float32),
            w3s, b3.astype(jnp.float32),
            w4s, b4.astype(jnp.float32))


def _choose_batch_tile(B, align, block_b):
    """Pick (tb, b_pad): big tiles to amortize per-step overhead, but keep
    >= 2 grid steps when B is large enough so v7x's two TCs both get work."""
    if B <= 2 * align:
        tb = _round_up(max(B, 1), align)          # tiny batch: single tile
    else:
        n_steps = max(2, pl.cdiv(B, block_b))
        tb = _round_up(pl.cdiv(B, n_steps), align)
        tb = min(tb, _round_up(block_b, align))
    b_pad = _round_up(B, tb)
    return tb, b_pad


def generator_forward(label, noise, prepped_params, *, block_b=4096,
                      out_dtype=jnp.float32):
    """label: (B, LABEL_DIM), noise: (B, LATENT_DIM) -> (B, SP_SIZE)."""
    B = label.shape[0]
    weights = prepped_params
    compute_dtype = weights[0].dtype

    # ---- batch tiling ----
    align = 8 if jnp.dtype(compute_dtype).itemsize == 4 else 16
    tb, b_pad = _choose_batch_tile(B, align, block_b)
    if b_pad != B:
        label = jnp.pad(label, ((0, b_pad - B), (0, 0)))
        noise = jnp.pad(noise, ((0, b_pad - B), (0, 0)))
    label = label.astype(compute_dtype)
    noise = noise.astype(compute_dtype)

    grid = (b_pad // tb,)
    batch_spec = lambda feat: pl.BlockSpec((tb, feat), lambda i: (i, 0))
    resident = lambda a: pl.BlockSpec(a.shape, lambda i: (0, 0))  # VMEM-resident

    flops = 2 * b_pad * (LABEL_DIM * HID1 + LATENT_DIM * HID1
                         + HID1 * SP_SIZE + SP_SIZE * SP_SIZE + SP_SIZE * SP_SIZE)
    transcendentals = 3 * b_pad * SP_SIZE
    bytes_accessed = int(
        (label.size + noise.size) * label.dtype.itemsize
        + b_pad * SP_SIZE * jnp.dtype(out_dtype).itemsize
        + sum(int(w.size) * w.dtype.itemsize for w in weights))

    out = pl.pallas_call(
        generator_kernel,
        out_shape=jax.ShapeDtypeStruct((b_pad, SP_SIZE), out_dtype),
        grid_spec=pl.GridSpec(
            grid=grid,
            in_specs=[batch_spec(LABEL_DIM), batch_spec(LATENT_DIM)]
                     + [resident(w) for w in weights],
            out_specs=pl.BlockSpec((tb, SP_SIZE), lambda i: (i, 0)),
        ),
        compiler_params=pltpu.CompilerParams(
            dimension_semantics=("parallel",),
            vmem_limit_bytes=32 * 1024 * 1024),
        cost_estimate=pl.CostEstimate(flops=flops,
                                      transcendentals=transcendentals,
                                      bytes_accessed=bytes_accessed),
    )(label, noise, *weights)

    return out[:B]


def init_params(key):
    """Deterministic Linear params; stored as (in, out) + (1, out) bias."""
    dims = [
        (LATENT_DIM + LABEL_DIM, HID1),    # Linear 1
        (HID1, SP_SIZE),                   # Linear 2
        (SP_SIZE, SP_SIZE),                # Linear 3
        (SP_SIZE, SP_SIZE),                # Linear 4 (no activation)
    ]
    params = []
    for (fan_in, fan_out) in dims:
        key, kw, kb = jax.random.split(key, 3)
        bound = 1.0 / jnp.sqrt(fan_in)
        w = jax.random.uniform(kw, (fan_in, fan_out), jnp.float32, -bound, bound)
        b = jax.random.uniform(kb, (1, fan_out), jnp.float32, -bound, bound)
        params.append((w, b))
    return params


def _selu(v):
    return _SELU_SCALE * jnp.where(v > 0, v, _SELU_ALPHA * (jnp.exp(v) - 1.0))


def reference_forward(label, noise, params):
    x = jnp.concatenate([label, noise], axis=-1)
    (w1, b1), (w2, b2), (w3, b3), (w4, b4) = params
    h = _selu(x @ w1 + b1)
    h = _selu(h @ w2 + b2)
    h = _selu(h @ w3 + b3)
    return h @ w4 + b4


# TODO(synk): `preconv` (Conv1d/BatchNorm1d/LeakyReLU) and `Residual`
# (restnet18cbam) are constructed in __init__ but never used by forward(),
# so they are intentionally not implemented.

if __name__ == "__main__":
    key = jax.random.PRNGKey(0)
    k_label, k_noise, k_params = jax.random.split(key, 3)
    params = init_params(k_params)

    # One-time parameter prep (hoisted out of the forward path).
    prepped_bf16 = prepare_params(params, compute_dtype=jnp.bfloat16)  # v6e/v7x default
    prepped_f32 = prepare_params(params, compute_dtype=jnp.float32)

    label = jax.random.normal(k_label, (BATCH, LABEL_DIM), jnp.float32)
    noise = jax.random.normal(k_noise, (BATCH, LATENT_DIM), jnp.float32)
    ref = reference_forward(label, noise, params)

    # Case 1: default bf16-operand path, small batch, single grid step.
    out = jax.block_until_ready(generator_forward(label, noise, prepped_bf16))
    assert out.shape == (BATCH, SP_SIZE)
    assert jnp.allclose(out, ref, atol=1e-1, rtol=1e-1), "mismatch (bf16 default)"

    # Case 2: f32-operand path, tight tolerance.
    out_f32 = jax.block_until_ready(generator_forward(label, noise, prepped_f32))
    assert out_f32.shape == (BATCH, SP_SIZE)
    assert jnp.allclose(out_f32, ref, atol=2e-3, rtol=2e-3), "mismatch (f32)"

    # Case 3: multi-step batch grid with padding (exercises the tiled path, f32).
    B2 = 40
    label2 = jax.random.normal(jax.random.PRNGKey(1), (B2, LABEL_DIM), jnp.float32)
    noise2 = jax.random.normal(jax.random.PRNGKey(2), (B2, LATENT_DIM), jnp.float32)
    out2 = jax.block_until_ready(
        generator_forward(label2, noise2, prepped_f32, block_b=16))
    ref2 = reference_forward(label2, noise2, params)
    assert out2.shape == (B2, SP_SIZE)
    assert jnp.allclose(out2, ref2, atol=2e-3, rtol=2e-3), "mismatch (tiled f32)"

    # Case 4: larger batch with the default tile heuristic (>= 2 grid steps), bf16.
    B3 = 100
    label3 = jax.random.normal(jax.random.PRNGKey(3), (B3, LABEL_DIM), jnp.float32)
    noise3 = jax.random.normal(jax.random.PRNGKey(4), (B3, LATENT_DIM), jnp.float32)
    out3 = jax.block_until_ready(generator_forward(label3, noise3, prepped_bf16))
    ref3 = reference_forward(label3, noise3, params)
    assert out3.shape == (B3, SP_SIZE)
    assert jnp.allclose(out3, ref3, atol=1e-1, rtol=1e-1), "mismatch (bf16 tiled)"

    print("KERNEL_OK")
</pallas_src>

<mosaic_0001>
module attributes {stable_mosaic.version = 11 : i64} {
  func.func @generator_kernel(%arg0: i32, %arg1: memref<16x16xbf16, #tpu.memory_space<vmem>>, %arg2: memref<16x16xbf16, #tpu.memory_space<vmem>>, %arg3: memref<16x32xbf16, #tpu.memory_space<vmem>>, %arg4: memref<16x32xbf16, #tpu.memory_space<vmem>>, %arg5: memref<1x32xf32, #tpu.memory_space<vmem>>, %arg6: memref<32x32xbf16, #tpu.memory_space<vmem>>, %arg7: memref<1x32xf32, #tpu.memory_space<vmem>>, %arg8: memref<32x32xbf16, #tpu.memory_space<vmem>>, %arg9: memref<1x32xf32, #tpu.memory_space<vmem>>, %arg10: memref<32x32xbf16, #tpu.memory_space<vmem>>, %arg11: memref<1x32xf32, #tpu.memory_space<vmem>>, %arg12: memref<16x32xf32, #tpu.memory_space<vmem>>) attributes {dimension_semantics = [#tpu.dimension_semantics<parallel>], iteration_bounds = array<i64: 1>, scalar_prefetch = 0 : i64, scratch_operands = 0 : i64, tpu.core_type = #tpu.core_type<tc>, window_params = [{transform_indices = @transform_0, window_bounds = array<i64: 16, 16>}, {transform_indices = @transform_1, window_bounds = array<i64: 16, 16>}, {pipeline_mode = #tpu.pipeline_mode<synchronous>, transform_indices = @transform_2, window_bounds = array<i64: 16, 32>}, {pipeline_mode = #tpu.pipeline_mode<synchronous>, transform_indices = @transform_3, window_bounds = array<i64: 16, 32>}, {pipeline_mode = #tpu.pipeline_mode<synchronous>, transform_indices = @transform_4, window_bounds = array<i64: 1, 32>}, {pipeline_mode = #tpu.pipeline_mode<synchronous>, transform_indices = @transform_5, window_bounds = array<i64: 32, 32>}, {pipeline_mode = #tpu.pipeline_mode<synchronous>, transform_indices = @transform_6, window_bounds = array<i64: 1, 32>}, {pipeline_mode = #tpu.pipeline_mode<synchronous>, transform_indices = @transform_7, window_bounds = array<i64: 32, 32>}, {pipeline_mode = #tpu.pipeline_mode<synchronous>, transform_indices = @transform_8, window_bounds = array<i64: 1, 32>}, {pipeline_mode = #tpu.pipeline_mode<synchronous>, transform_indices = @transform_9, window_bounds = array<i64: 32, 32>}, {pipeline_mode = #tpu.pipeline_mode<synchronous>, transform_indices = @transform_10, window_bounds = array<i64: 1, 32>}, {transform_indices = @transform_11, window_bounds = array<i64: 16, 32>}]} {
    %c0 = arith.constant 0 : index
    %c0_0 = arith.constant 0 : index
    %0 = vector.load %arg1[%c0, %c0_0] : memref<16x16xbf16, #tpu.memory_space<vmem>>, vector<16x16xbf16>
    %c0_1 = arith.constant 0 : index
    %c0_2 = arith.constant 0 : index
    %1 = vector.load %arg3[%c0_1, %c0_2] : memref<16x32xbf16, #tpu.memory_space<vmem>>, vector<16x32xbf16>
    %cst = arith.constant dense<0.000000e+00> : vector<16x32xf32>
    %2 = tpu.matmul %0, %1, %cst {dimension_numbers = #tpu.dot_dimension_numbers<[1], [0], [0], [1], [0, 0, 1, 1], [], []>} : vector<16x16xbf16>, vector<16x32xbf16>, vector<16x32xf32> -> vector<16x32xf32>
    %c0_3 = arith.constant 0 : index
    %c0_4 = arith.constant 0 : index
    %3 = vector.load %arg2[%c0_3, %c0_4] : memref<16x16xbf16, #tpu.memory_space<vmem>>, vector<16x16xbf16>
    %c0_5 = arith.constant 0 : index
    %c0_6 = arith.constant 0 : index
    %4 = vector.load %arg4[%c0_5, %c0_6] : memref<16x32xbf16, #tpu.memory_space<vmem>>, vector<16x32xbf16>
    %cst_7 = arith.constant dense<0.000000e+00> : vector<16x32xf32>
    %5 = tpu.matmul %3, %4, %cst_7 {dimension_numbers = #tpu.dot_dimension_numbers<[1], [0], [0], [1], [0, 0, 1, 1], [], []>} : vector<16x16xbf16>, vector<16x32xbf16>, vector<16x32xf32> -> vector<16x32xf32>
    %6 = arith.addf %2, %5 : vector<16x32xf32>
    %c0_8 = arith.constant 0 : index
    %c0_9 = arith.constant 0 : index
    %7 = vector.load %arg5[%c0_8, %c0_9] : memref<1x32xf32, #tpu.memory_space<vmem>>, vector<1x32xf32>
    %8 = vector.broadcast %7 : vector<1x32xf32> to vector<16x32xf32>
    %9 = arith.addf %6, %8 : vector<16x32xf32>
    %cst_10 = arith.constant 0.000000e+00 : f32
    %10 = vector.broadcast %cst_10 : f32 to vector<16x32xf32>
    %11 = arith.cmpf ogt, %9, %10 : vector<16x32xf32>
    %12 = math.exp %9 : vector<16x32xf32>
    %cst_11 = arith.constant 1.000000e+00 : f32
    %13 = vector.broadcast %cst_11 : f32 to vector<16x32xf32>
    %14 = arith.subf %12, %13 : vector<16x32xf32>
    %cst_12 = arith.constant 1.67326319 : f32
    %15 = vector.broadcast %cst_12 : f32 to vector<16x32xf32>
    %16 = arith.mulf %15, %14 : vector<16x32xf32>
    %17 = arith.select %11, %9, %16 : vector<16x32xi1>, vector<16x32xf32>
    %18 = arith.truncf %17 : vector<16x32xf32> to vector<16x32xbf16>
    %c0_13 = arith.constant 0 : index
    %c0_14 = arith.constant 0 : index
    %19 = vector.load %arg6[%c0_13, %c0_14] : memref<32x32xbf16, #tpu.memory_space<vmem>>, vector<32x32xbf16>
    %cst_15 = arith.constant dense<0.000000e+00> : vector<16x32xf32>
    %20 = tpu.matmul %18, %19, %cst_15 {dimension_numbers = #tpu.dot_dimension_numbers<[1], [0], [0], [1], [0, 0, 1, 1], [], []>} : vector<16x32xbf16>, vector<32x32xbf16>, vector<16x32xf32> -> vector<16x32xf32>
    %c0_16 = arith.constant 0 : index
    %c0_17 = arith.constant 0 : index
    %21 = vector.load %arg7[%c0_16, %c0_17] : memref<1x32xf32, #tpu.memory_space<vmem>>, vector<1x32xf32>
    %22 = vector.broadcast %21 : vector<1x32xf32> to vector<16x32xf32>
    %23 = arith.addf %20, %22 : vector<16x32xf32>
    %cst_18 = arith.constant 0.000000e+00 : f32
    %24 = vector.broadcast %cst_18 : f32 to vector<16x32xf32>
    %25 = arith.cmpf ogt, %23, %24 : vector<16x32xf32>
    %26 = math.exp %23 : vector<16x32xf32>
    %cst_19 = arith.constant 1.000000e+00 : f32
    %27 = vector.broadcast %cst_19 : f32 to vector<16x32xf32>
    %28 = arith.subf %26, %27 : vector<16x32xf32>
    %cst_20 = arith.constant 1.67326319 : f32
    %29 = vector.broadcast %cst_20 : f32 to vector<16x32xf32>
    %30 = arith.mulf %29, %28 : vector<16x32xf32>
    %31 = arith.select %25, %23, %30 : vector<16x32xi1>, vector<16x32xf32>
    %32 = arith.truncf %31 : vector<16x32xf32> to vector<16x32xbf16>
    %c0_21 = arith.constant 0 : index
    %c0_22 = arith.constant 0 : index
    %33 = vector.load %arg8[%c0_21, %c0_22] : memref<32x32xbf16, #tpu.memory_space<vmem>>, vector<32x32xbf16>
    %cst_23 = arith.constant dense<0.000000e+00> : vector<16x32xf32>
    %34 = tpu.matmul %32, %33, %cst_23 {dimension_numbers = #tpu.dot_dimension_numbers<[1], [0], [0], [1], [0, 0, 1, 1], [], []>} : vector<16x32xbf16>, vector<32x32xbf16>, vector<16x32xf32> -> vector<16x32xf32>
    %c0_24 = arith.constant 0 : index
    %c0_25 = arith.constant 0 : index
    %35 = vector.load %arg9[%c0_24, %c0_25] : memref<1x32xf32, #tpu.memory_space<vmem>>, vector<1x32xf32>
    %36 = vector.broadcast %35 : vector<1x32xf32> to vector<16x32xf32>
    %37 = arith.addf %34, %36 : vector<16x32xf32>
    %cst_26 = arith.constant 0.000000e+00 : f32
    %38 = vector.broadcast %cst_26 : f32 to vector<16x32xf32>
    %39 = arith.cmpf ogt, %37, %38 : vector<16x32xf32>
    %40 = math.exp %37 : vector<16x32xf32>
    %cst_27 = arith.constant 1.000000e+00 : f32
    %41 = vector.broadcast %cst_27 : f32 to vector<16x32xf32>
    %42 = arith.subf %40, %41 : vector<16x32xf32>
    %cst_28 = arith.constant 1.67326319 : f32
    %43 = vector.broadcast %cst_28 : f32 to vector<16x32xf32>
    %44 = arith.mulf %43, %42 : vector<16x32xf32>
    %45 = arith.select %39, %37, %44 : vector<16x32xi1>, vector<16x32xf32>
    %46 = arith.truncf %45 : vector<16x32xf32> to vector<16x32xbf16>
    %c0_29 = arith.constant 0 : index
    %c0_30 = arith.constant 0 : index
    %47 = vector.load %arg10[%c0_29, %c0_30] : memref<32x32xbf16, #tpu.memory_space<vmem>>, vector<32x32xbf16>
    %cst_31 = arith.constant dense<0.000000e+00> : vector<16x32xf32>
    %48 = tpu.matmul %46, %47, %cst_31 {dimension_numbers = #tpu.dot_dimension_numbers<[1], [0], [0], [1], [0, 0, 1, 1], [], []>} : vector<16x32xbf16>, vector<32x32xbf16>, vector<16x32xf32> -> vector<16x32xf32>
    %c0_32 = arith.constant 0 : index
    %c0_33 = arith.constant 0 : index
    %49 = vector.load %arg11[%c0_32, %c0_33] : memref<1x32xf32, #tpu.memory_space<vmem>>, vector<1x32xf32>
    %50 = vector.broadcast %49 : vector<1x32xf32> to vector<16x32xf32>
    %51 = arith.addf %48, %50 : vector<16x32xf32>
    %c0_34 = arith.constant 0 : index
    %c0_35 = arith.constant 0 : index
    %52 = vector.load %arg12[%c0_34, %c0_35] : memref<16x32xf32, #tpu.memory_space<vmem>>, vector<16x32xf32>
    tpu.vector_store %arg12[%c0_34, %c0_35], %51 {strides = array<i32>} : memref<16x32xf32, #tpu.memory_space<vmem>>, vector<16x32xf32>,
    return
  }
  func.func @transform_0(%arg0: i32) -> (i32, i32) {
    %c0_i32 = arith.constant 0 : i32
    %c0_i32_0 = arith.constant 0 : i32
    return %arg0, %c0_i32 : i32, i32
  }
  func.func @transform_1(%arg0: i32) -> (i32, i32) {
    %c0_i32 = arith.constant 0 : i32
    %c0_i32_0 = arith.constant 0 : i32
    return %arg0, %c0_i32 : i32, i32
  }
  func.func @transform_2(%arg0: i32) -> (i32, i32) {
    %c0_i32 = arith.constant 0 : i32
    %c0_i32_0 = arith.constant 0 : i32
    %c0_i32_1 = arith.constant 0 : i32
    return %c0_i32, %c0_i32_0 : i32, i32
  }
  func.func @transform_3(%arg0: i32) -> (i32, i32) {
    %c0_i32 = arith.constant 0 : i32
    %c0_i32_0 = arith.constant 0 : i32
    %c0_i32_1 = arith.constant 0 : i32
    return %c0_i32, %c0_i32_0 : i32, i32
  }
  func.func @transform_4(%arg0: i32) -> (i32, i32) {
    %c0_i32 = arith.constant 0 : i32
    %c0_i32_0 = arith.constant 0 : i32
    %c0_i32_1 = arith.constant 0 : i32
    return %c0_i32, %c0_i32_0 : i32, i32
  }
  func.func @transform_5(%arg0: i32) -> (i32, i32) {
    %c0_i32 = arith.constant 0 : i32
    %c0_i32_0 = arith.constant 0 : i32
    %c0_i32_1 = arith.constant 0 : i32
    return %c0_i32, %c0_i32_0 : i32, i32
  }
  func.func @transform_6(%arg0: i32) -> (i32, i32) {
    %c0_i32 = arith.constant 0 : i32
    %c0_i32_0 = arith.constant 0 : i32
    %c0_i32_1 = arith.constant 0 : i32
    return %c0_i32, %c0_i32_0 : i32, i32
  }
  func.func @transform_7(%arg0: i32) -> (i32, i32) {
    %c0_i32 = arith.constant 0 : i32
    %c0_i32_0 = arith.constant 0 : i32
    %c0_i32_1 = arith.constant 0 : i32
    return %c0_i32, %c0_i32_0 : i32, i32
  }
  func.func @transform_8(%arg0: i32) -> (i32, i32) {
    %c0_i32 = arith.constant 0 : i32
    %c0_i32_0 = arith.constant 0 : i32
    %c0_i32_1 = arith.constant 0 : i32
    return %c0_i32, %c0_i32_0 : i32, i32
  }
  func.func @transform_9(%arg0: i32) -> (i32, i32) {
    %c0_i32 = arith.constant 0 : i32
    %c0_i32_0 = arith.constant 0 : i32
    %c0_i32_1 = arith.constant 0 : i32
    return %c0_i32, %c0_i32_0 : i32, i32
  }
  func.func @transform_10(%arg0: i32) -> (i32, i32) {
    %c0_i32 = arith.constant 0 : i32
    %c0_i32_0 = arith.constant 0 : i32
    %c0_i32_1 = arith.constant 0 : i32
    return %c0_i32, %c0_i32_0 : i32, i32
  }
  func.func @transform_11(%arg0: i32) -> (i32, i32) {
    %c0_i32 = arith.constant 0 : i32
    %c0_i32_0 = arith.constant 0 : i32
    return %arg0, %c0_i32 : i32, i32
  }
}

</mosaic_0001>

<llo_original>
// kernel: tpu_custom_call.1
$region0: #{tpu_custom_call.1}
  #allocation0 [shape = 'u32[]', space=smem, size = 0x4, offset = 0x4, fixed_abs, tag = 'smem constant byte address 0x4 - core index']
  #allocation1 [shape = 'u32[144,128]{1,0:T(1,128)}', space=vmem, size = 0x12000, scoped, tag = 'internal scratch']
  %s0 = inlined_call_operand.hbm [shape: bf16[16,16], index: 0, kind: input, shape index: {}]
  %s1 = inlined_call_operand.hbm [shape: bf16[16,16], index: 1, kind: input, shape index: {}]
  %s2 = inlined_call_operand.hbm [shape: bf16[16,32], index: 2, kind: input, shape index: {}]
  %s3 = inlined_call_operand.hbm [shape: bf16[16,32], index: 3, kind: input, shape index: {}]
  %s4 = inlined_call_operand.vmem [shape: f32[1,32], index: 4, kind: input, shape index: {}]
  %s5 = inlined_call_operand.vmem [shape: bf16[32,32], index: 5, kind: input, shape index: {}]
  %s6 = inlined_call_operand.vmem [shape: f32[1,32], index: 6, kind: input, shape index: {}]
  %s7 = inlined_call_operand.hbm [shape: bf16[32,32], index: 7, kind: input, shape index: {}]
  %s8 = inlined_call_operand.hbm [shape: f32[1,32], index: 8, kind: input, shape index: {}]
  %s9 = inlined_call_operand.vmem [shape: bf16[32,32], index: 9, kind: input, shape index: {}]
  %s10 = inlined_call_operand.vmem [shape: f32[1,32], index: 10, kind: input, shape index: {}]
  %s11 = inlined_call_operand.hbm [shape: f32[16,32], index: 11, kind: output, shape index: {}]
  %s12 = sld [smem:[#allocation0]]
  $region78: #{tpu_custom_call.1} parent=0
    _
  %s14 = ssub.s32 1, %s12
  %s15 = scalar_select 0, %s14, %s12
  $region1: #{tpu_custom_call.1} parent=0
    #allocation2 [shape = 'u8[4096]{0}', space=vmem, size = 0x1000, scoped, tag = 'input window, operand 0, single buffered']
    #allocation3 [shape = 's32[1]{0}', space=sflag, size = 0x4, scoped, tag = 'scoped memory for tpu_custom_call.1']
    #allocation4 [shape = 's32[1]{0}', space=sflag, size = 0x4, scoped, tag = 'scoped memory for tpu_custom_call.1']
    #allocation5 [shape = 'u8[4096]{0}', space=vmem, size = 0x1000, scoped, tag = 'input window, operand 1, single buffered']
    #allocation6 [shape = 's32[1]{0}', space=sflag, size = 0x4, scoped, tag = 'scoped memory for tpu_custom_call.1']
    #allocation7 [shape = 'u8[4096]{0}', space=vmem, size = 0x1000, scoped, tag = 'input window, operand 2, single buffered']
    #allocation8 [shape = 'u8[4096]{0}', space=vmem, size = 0x1000, scoped, tag = 'input window, operand 3, single buffered']
    #allocation9 [shape = 's32[1]{0}', space=sflag, size = 0x4, scoped, tag = 'scoped memory for tpu_custom_call.1']
    #allocation10 [shape = 'u8[8192]{0}', space=vmem, size = 0x2000, scoped, tag = 'input window, operand 7, single buffered']
    #allocation11 [shape = 'u8[512]{0}', space=vmem, size = 0x400, scoped, tag = 'input window, operand 8, single buffered']
    #allocation12 [shape = 's32[1]{0}', space=sflag, size = 0x4, scoped, tag = 'scoped memory for tpu_custom_call.1']
    #allocation13 [shape = 'u8[8192]{0}', space=vmem, size = 0x2000, scoped, tag = 'output window, operand 0, single buffered']
    %16 = vsyncpa [#allocation3], 0
    %17 = vsyncpa [#allocation6], 0
    %18 = vsyncpa [#allocation9], 0
    %19 = vsyncpa [#allocation12], 0
    %20 = vsyncpa [#allocation4], 0
    // Predicated region
    $region2: #{tpu_custom_call.1} parent=1 // pred_check
      _
    $region3: #{tpu_custom_call.1} parent=1 // pred_check_branch
      %22 = sbr.rel (0) target = $region5
    $region4: #{tpu_custom_call.1} parent=1 // pred_region
      %s24 = ssub.s32 128, 128
      %25 = vsyncadd [#allocation3], %s24
      %s26 = sshll.u32 [#allocation2], 4
      %s27 = int_to_ptr.vmem [resolvable:$true] %s26
      %32 = dma.hbm_to_vmem [thread:$0]  %s0, 128, %s27, [#allocation3], 64, 64, 4
    $region5: #{tpu_custom_call.1} parent=1 // pred_fallthru
      _
    // Predicated region
    $region6: #{tpu_custom_call.1} parent=1 // pred_check
      _
    $region7: #{tpu_custom_call.1} parent=1 // pred_check_branch
      %34 = sbr.rel (0) target = $region9
    $region8: #{tpu_custom_call.1} parent=1 // pred_region
      %s36 = ssub.s32 128, 128
      %37 = vsyncadd [#allocation6], %s36
      %s38 = sshll.u32 [#allocation5], 4
      %s39 = int_to_ptr.vmem [resolvable:$true] %s38
      %44 = dma.hbm_to_vmem [thread:$0]  %s1, 128, %s39, [#allocation6], 64, 64, 4
    $region9: #{tpu_custom_call.1} parent=1 // pred_fallthru
      _
    // Predicated region
    $region10: #{tpu_custom_call.1} parent=1 // pred_check
      _
    $region11: #{tpu_custom_call.1} parent=1 // pred_check_branch
      %46 = sbr.rel (0) target = $region13
    $region12: #{tpu_custom_call.1} parent=1 // pred_region
      %s48 = ssub.s32 128, 128
      %49 = vsyncadd [#allocation6], %s48
      %s50 = sshll.u32 [#allocation7], 4
      %s51 = int_to_ptr.vmem [resolvable:$true] %s50
      %56 = dma.hbm_to_vmem [thread:$0]  %s2, 128, %s51, [#allocation6], 64, 64, 4
    $region13: #{tpu_custom_call.1} parent=1 // pred_fallthru
      _
    // Predicated region
    $region14: #{tpu_custom_call.1} parent=1 // pred_check
      _
    $region15: #{tpu_custom_call.1} parent=1 // pred_check_branch
      %58 = sbr.rel (0) target = $region17
    $region16: #{tpu_custom_call.1} parent=1 // pred_region
      %s60 = ssub.s32 128, 128
      %61 = vsyncadd [#allocation9], %s60
      %s62 = sshll.u32 [#allocation8], 4
      %s63 = int_to_ptr.vmem [resolvable:$true] %s62
      %68 = dma.hbm_to_vmem [thread:$0]  %s3, 128, %s63, [#allocation9], 64, 64, 4
    $region17: #{tpu_custom_call.1} parent=1 // pred_fallthru
      _
    // Predicated region
    $region18: #{tpu_custom_call.1} parent=1 // pred_check
      _
    $region19: #{tpu_custom_call.1} parent=1 // pred_check_branch
      %70 = sbr.rel (0) target = $region21
    $region20: #{tpu_custom_call.1} parent=1 // pred_region
      _
    $region21: #{tpu_custom_call.1} parent=1 // pred_fallthru
      _
    // Predicated region
    $region22: #{tpu_custom_call.1} parent=1 // pred_check
      _
    $region23: #{tpu_custom_call.1} parent=1 // pred_check_branch
      %72 = sbr.rel (0) target = $region25
    $region24: #{tpu_custom_call.1} parent=1 // pred_region
      _
    $region25: #{tpu_custom_call.1} parent=1 // pred_fallthru
      _
    // Predicated region
    $region26: #{tpu_custom_call.1} parent=1 // pred_check
      _
    $region27: #{tpu_custom_call.1} parent=1 // pred_check_branch
      %74 = sbr.rel (0) target = $region29
    $region28: #{tpu_custom_call.1} parent=1 // pred_region
      _
    $region29: #{tpu_custom_call.1} parent=1 // pred_fallthru
      _
    // Predicated region
    $region30: #{tpu_custom_call.1} parent=1 // pred_check
      _
    $region31: #{tpu_custom_call.1} parent=1 // pred_check_branch
      %76 = sbr.rel (0) target = $region33
    $region32: #{tpu_custom_call.1} parent=1 // pred_region
      %s78 = ssub.s32 256, 256
      %79 = vsyncadd [#allocation9], %s78
      %s80 = sshll.u32 [#allocation10], 4
      %s81 = int_to_ptr.vmem [resolvable:$true] %s80
      %86 = dma.hbm_to_vmem [thread:$0]  %s7, 256, %s81, [#allocation9], 64, 64, 4
    $region33: #{tpu_custom_call.1} parent=1 // pred_fallthru
      _
    // Predicated region
    $region34: #{tpu_custom_call.1} parent=1 // pred_check
      _
    $region35: #{tpu_custom_call.1} parent=1 // pred_check_branch
      %88 = sbr.rel (0) target = $region37
    $region36: #{tpu_custom_call.1} parent=1 // pred_region
      %s90 = ssub.s32 16, 16
      %91 = vsyncadd [#allocation12], %s90
      %s93 = sshll.u32 [#allocation11], 4
      %s94 = int_to_ptr.vmem [resolvable:$true] %s93
      %96 = dma.hbm_to_vmem [thread:$0]  %s8, 16, %s94, [#allocation12]
    $region37: #{tpu_custom_call.1} parent=1 // pred_fallthru
      _
    // Predicated region
    $region38: #{tpu_custom_call.1} parent=1 // pred_check
      _
    $region39: #{tpu_custom_call.1} parent=1 // pred_check_branch
      %98 = sbr.rel (0) target = $region41
    $region40: #{tpu_custom_call.1} parent=1 // pred_region
      _
    $region41: #{tpu_custom_call.1} parent=1 // pred_fallthru
      _
    // Predicated region
    $region42: #{tpu_custom_call.1} parent=1 // pred_check
      _
    $region43: #{tpu_custom_call.1} parent=1 // pred_check_branch
      %100 = sbr.rel (0) target = $region45
    $region44: #{tpu_custom_call.1} parent=1 // pred_region
      _
    $region45: #{tpu_custom_call.1} parent=1 // pred_fallthru
      _
    // Predicated region
    $region46: #{tpu_custom_call.1} parent=1 // pred_check
      _
    $region47: #{tpu_custom_call.1} parent=1 // pred_check_branch
      %102 = sbr.rel (0) target = $region49
    $region48: #{tpu_custom_call.1} parent=1 // pred_region
      %103 = dma.done [#allocation3], 128
    $region49: #{tpu_custom_call.1} parent=1 // pred_fallthru
      _
    // Predicated region
    $region50: #{tpu_custom_call.1} parent=1 // pred_check
      _
    $region51: #{tpu_custom_call.1} parent=1 // pred_check_branch
      %105 = sbr.rel (0) target = $region53
    $region52: #{tpu_custom_call.1} parent=1 // pred_region
      %106 = dma.done [#allocation6], 128
    $region53: #{tpu_custom_call.1} parent=1 // pred_fallthru
      _
    // Predicated region
    $region54: #{tpu_custom_call.1} parent=1 // pred_check
      _
    $region55: #{tpu_custom_call.1} parent=1 // pred_check_branch
      %108 = sbr.rel (0) target = $region57
    $region56: #{tpu_custom_call.1} parent=1 // pred_region
      %109 = dma.done [#allocation6], 128
    $region57: #{tpu_custom_call.1} parent=1 // pred_fallthru
      _
    // Predicated region
    $region58: #{tpu_custom_call.1} parent=1 // pred_check
      _
    $region59: #{tpu_custom_call.1} parent=1 // pred_check_branch
      %111 = sbr.rel (0) target = $region61
    $region60: #{tpu_custom_call.1} parent=1 // pred_region
      %112 = dma.done [#allocation9], 128
    $region61: #{tpu_custom_call.1} parent=1 // pred_fallthru
      _
    // Predicated region
    $region62: #{tpu_custom_call.1} parent=1 // pred_check
      _
    $region63: #{tpu_custom_call.1} parent=1 // pred_check_branch
      %114 = sbr.rel (0) target = $region65
    $region64: #{tpu_custom_call.1} parent=1 // pred_region
      %115 = dma.done [#allocation9], 256
    $region65: #{tpu_custom_call.1} parent=1 // pred_fallthru
      _
    // Predicated region
    $region66: #{tpu_custom_call.1} parent=1 // pred_check
      _
    $region67: #{tpu_custom_call.1} parent=1 // pred_check_branch
      %117 = sbr.rel (0) target = $region69
    $region68: #{tpu_custom_call.1} parent=1 // pred_region
      %118 = dma.done [#allocation12], 16
    $region69: #{tpu_custom_call.1} parent=1 // pred_fallthru
      _
    %v120 = vld [vmem:[#allocation2] sm:$0xf]
    %v121 = vld [vmem:[#allocation2 + $0x4] sm:$0xf]
    %v122 = vld [vmem:[#allocation7] sm:$0xf]
    %v123 = vld [vmem:[#allocation7 + $0x4] sm:$0xf]
    %v124 = vld [vmem:[#allocation5] sm:$0xf]
    %v125 = vld [vmem:[#allocation5 + $0x4] sm:$0xf]
    %v126 = vld [vmem:[#allocation8] sm:$0xf]
    %v127 = vld [vmem:[#allocation8 + $0x4] sm:$0xf]
    %v130 = vunpack.c.l.b16 %v124
    %v131 = vunpack.c.l.b16 %v125
    %v132 = vpack.c.b16 %v131, %v130
    %v135 = vunpack.c.l.b16 %v126
    %v136 = vunpack.c.l.b16 %v127
    %v137 = vpack.c.b16 %v136, %v135
    %vm139 = vcmask 130048
    %v141 = vsel %vm139, %v132, 0
    %143 = vmatprep.subr.bf16.mxu0 0
    %144 = vmatpush1.bf16.msra.mxu0 %v137
    %145 = vmatprep.subr.bf16.mxu0 0
    %146 = vmatpush1.bf16.msra.mxu0 0
    %147 = vmatprep.subr.bf16.mxu0 0
    %148 = vmatpush1.bf16.msra.mxu0 0
    %149 = vmatprep.subr.bf16.mxu0 0
    %150 = vmatpush1.bf16.msra.mxu0 0
    %151 = vmatprep.subr.bf16.mxu0 0
    %152 = vmatpush1.bf16.msra.mxu0 0
    %153 = vmatprep.subr.bf16.mxu0 0
    %154 = vmatpush1.bf16.msra.mxu0 0
    %155 = vmatprep.subr.bf16.mxu0 0
    %156 = vmatpush1.bf16.msra.mxu0 0
    %157 = vmatprep.subr.bf16.mxu0 0
    %158 = vmatpush1.bf16.msra.mxu0 0
    %159 = vmatprep.subr.bf16.mxu0 0
    %160 = vmatpush1.bf16.msra.mxu0 0
    %161 = vmatprep.subr.bf16.mxu0 0
    %162 = vmatpush1.bf16.msra.mxu0 0
    %163 = vmatprep.subr.bf16.mxu0 0
    %164 = vmatpush1.bf16.msra.mxu0 0
    %165 = vmatprep.subr.bf16.mxu0 0
    %166 = vmatpush1.bf16.msra.mxu0 0
    %167 = vmatprep.subr.bf16.mxu0 0
    %168 = vmatpush1.bf16.msra.mxu0 0
    %169 = vmatprep.subr.bf16.mxu0 0
    %170 = vmatpush1.bf16.msra.mxu0 0
    %171 = vmatprep.subr.bf16.mxu0 0
    %172 = vmatpush1.bf16.msra.mxu0 0
    %173 = vmatprep.subr.bf16.mxu0 0
    %174 = vmatpush1.bf16.msra.mxu0 0
    %175 = vmatprep.mubr.bf16.mxu0 0
    %176 = vmatmul.mubr.bf16.gmra.mrb[0].mxu0 %v141
    %v177 = vpop.f32.mrb[0].mxu0
    %v178 = vadd.f32 0.0, %v177
    %v179 = vpop.f32.mrb[0].mxu0
    %v180 = vpop.f32.mrb[0].mxu0
    %v181 = vadd.f32 0.0, %v180
    %v182 = vpop.f32.mrb[0].mxu0
    %183 = vdwg.mxu0
    %v186 = vunpack.c.l.b16 %v120
    %v187 = vunpack.c.l.b16 %v121
    %v188 = vpack.c.b16 %v187, %v186
    %v191 = vunpack.c.l.b16 %v122
    %v192 = vunpack.c.l.b16 %v123
    %v193 = vpack.c.b16 %v192, %v191
    %v196 = vsel %vm139, %v188, 0
    %198 = vmatprep.subr.bf16.mxu0 0
    %199 = vmatpush1.bf16.msra.mxu0 %v193
    %200 = vmatprep.subr.bf16.mxu0 0
    %201 = vmatpush1.bf16.msra.mxu0 0
    %202 = vmatprep.subr.bf16.mxu0 0
    %203 = vmatpush1.bf16.msra.mxu0 0
    %204 = vmatprep.subr.bf16.mxu0 0
    %205 = vmatpush1.bf16.msra.mxu0 0
    %206 = vmatprep.subr.bf16.mxu0 0
    %207 = vmatpush1.bf16.msra.mxu0 0
    %208 = vmatprep.subr.bf16.mxu0 0
    %209 = vmatpush1.bf16.msra.mxu0 0
    %210 = vmatprep.subr.bf16.mxu0 0
    %211 = vmatpush1.bf16.msra.mxu0 0
    %212 = vmatprep.subr.bf16.mxu0 0
    %213 = vmatpush1.bf16.msra.mxu0 0
    %214 = vmatprep.subr.bf16.mxu0 0
    %215 = vmatpush1.bf16.msra.mxu0 0
    %216 = vmatprep.subr.bf16.mxu0 0
    %217 = vmatpush1.bf16.msra.mxu0 0
    %218 = vmatprep.subr.bf16.mxu0 0
    %219 = vmatpush1.bf16.msra.mxu0 0
    %220 = vmatprep.subr.bf16.mxu0 0
    %221 = vmatpush1.bf16.msra.mxu0 0
    %222 = vmatprep.subr.bf16.mxu0 0
    %223 = vmatpush1.bf16.msra.mxu0 0
    %224 = vmatprep.subr.bf16.mxu0 0
    %225 = vmatpush1.bf16.msra.mxu0 0
    %226 = vmatprep.subr.bf16.mxu0 0
    %227 = vmatpush1.bf16.msra.mxu0 0
    %228 = vmatprep.subr.bf16.mxu0 0
    %229 = vmatpush1.bf16.msra.mxu0 0
    %230 = vmatprep.mubr.bf16.mxu0 0
    %231 = vmatmul.mubr.bf16.gmra.mrb[0].mxu0 %v196
    %v232 = vpop.f32.mrb[0].mxu0
    %v233 = vadd.f32 %v178, %v232
    %v234 = vpop.f32.mrb[0].mxu0
    %v235 = vpop.f32.mrb[0].mxu0
    %v236 = vadd.f32 %v181, %v235
    %v237 = vpop.f32.mrb[0].mxu0
    %238 = vdwg.mxu0
    %v239 = vld [vmem:[%s4] sm:$0x1]
    %v241 = vlaneseq
    %v242 = vshrl.u32 %v241, 7
    %v243 = vsub.s32 0, %v242
    %v244 = vrot.slane %v239, %v243
    %v246 = vadd.f32 %v233, %v244
    %v247 = vadd.f32 %v236, %v244
    %vm248 = vcmp.gt.f32.partialorder %v246, 0.0
    %vm249 = vcmp.gt.f32.partialorder %v247, 0.0
    %v250 = vmul.f32 %v246, 1.442695
    %v251 = vpow.pop %v250
    %v252 = vmul.f32 %v247, 1.442695
    %v253 = vpow.pop %v252
    %v254 = vsub.f32 %v251, 1.0
    %v255 = vsub.f32 %v253, 1.0
    %v256 = vmul.f32 %v254, 1.6732632
    %v257 = vmul.f32 %v255, 1.6732632
    %v258 = vsel %vm248, %v246, %v256
    %v259 = vsel %vm249, %v247, %v257
    %v260 = vpack.c.bf16 %v259, %v258
    %v261 = vld [vmem:[%s5] sm:$0xf]
    %v262 = vld [vmem:[%s5 + $0x4] sm:$0xf]
    %v263 = vld [vmem:[%s5 + $0x8] sm:$0xf]
    %v264 = vld [vmem:[%s5 + $0xc] sm:$0xf]
    %v265 = vld [vmem:[%s6] sm:$0x1]
    %v267 = vlaneseq
    %v268 = vshrl.u32 %v267, 7
    %v269 = vsub.s32 0, %v268
    %v270 = vrot.slane %v265, %v269
    %v276 = vunpack.c.l.b16 %v261
    %v277 = vunpack.c.l.b16 %v262
    %v278 = vunpack.c.l.b16 %v263
    %v279 = vunpack.c.l.b16 %v264
    %v280 = vpack.c.b16 %v277, %v276
    %v281 = vpack.c.b16 %v279, %v278
    %vm284 = vcmask 261120
    %v286 = vsel %vm284, %v260, 0
    %288 = vmatprep.subr.bf16.mxu0 0
    %289 = vmatpush1.bf16.msra.mxu0 %v280
    %290 = vmatprep.subr.bf16.mxu0 0
    %291 = vmatpush1.bf16.msra.mxu0 %v281
    %292 = vmatprep.subr.bf16.mxu0 0
    %293 = vmatpush1.bf16.msra.mxu0 0
    %294 = vmatprep.subr.bf16.mxu0 0
    %295 = vmatpush1.bf16.msra.mxu0 0
    %296 = vmatprep.subr.bf16.mxu0 0
    %297 = vmatpush1.bf16.msra.mxu0 0
    %298 = vmatprep.subr.bf16.mxu0 0
    %299 = vmatpush1.bf16.msra.mxu0 0
    %300 = vmatprep.subr.bf16.mxu0 0
    %301 = vmatpush1.bf16.msra.mxu0 0
    %302 = vmatprep.subr.bf16.mxu0 0
    %303 = vmatpush1.bf16.msra.mxu0 0
    %304 = vmatprep.subr.bf16.mxu0 0
    %305 = vmatpush1.bf16.msra.mxu0 0
    %306 = vmatprep.subr.bf16.mxu0 0
    %307 = vmatpush1.bf16.msra.mxu0 0
    %308 = vmatprep.subr.bf16.mxu0 0
    %309 = vmatpush1.bf16.msra.mxu0 0
    %310 = vmatprep.subr.bf16.mxu0 0
    %311 = vmatpush1.bf16.msra.mxu0 0
    %312 = vmatprep.subr.bf16.mxu0 0
    %313 = vmatpush1.bf16.msra.mxu0 0
    %314 = vmatprep.subr.bf16.mxu0 0
    %315 = vmatpush1.bf16.msra.mxu0 0
    %316 = vmatprep.subr.bf16.mxu0 0
    %317 = vmatpush1.bf16.msra.mxu0 0
    %318 = vmatprep.subr.bf16.mxu0 0
    %319 = vmatpush1.bf16.msra.mxu0 0
    %320 = vmatprep.mubr.bf16.mxu0 0
    %321 = vmatmul.mubr.bf16.gmra.mrb[0].mxu0 %v286
    %v322 = vpop.f32.mrb[0].mxu0
    %v323 = vadd.f32 %v270, %v322
    %v324 = vpop.f32.mrb[0].mxu0
    %v325 = vpop.f32.mrb[0].mxu0
    %v326 = vadd.f32 %v270, %v325
    %v327 = vpop.f32.mrb[0].mxu0
    %328 = vdwg.mxu0
    %vm329 = vcmp.gt.f32.partialorder %v323, 0.0
    %vm330 = vcmp.gt.f32.partialorder %v326, 0.0
    %v331 = vmul.f32 %v323, 1.442695
    %v332 = vpow.pop %v331
    %v333 = vmul.f32 %v326, 1.442695
    %v334 = vpow.pop %v333
    %v335 = vsub.f32 %v332, 1.0
    %v336 = vsub.f32 %v334, 1.0
    %v337 = vmul.f32 %v335, 1.6732632
    %v338 = vmul.f32 %v336, 1.6732632
    %v339 = vsel %vm329, %v323, %v337
    %v340 = vsel %vm330, %v326, %v338
    %v341 = vpack.c.bf16 %v340, %v339
    %v342 = vld [vmem:[#allocation10] sm:$0xf]
    %v343 = vld [vmem:[#allocation10 + $0x4] sm:$0xf]
    %v344 = vld [vmem:[#allocation10 + $0x8] sm:$0xf]
    %v345 = vld [vmem:[#allocation10 + $0xc] sm:$0xf]
    %v346 = vld [vmem:[#allocation11] sm:$0x1]
    %v348 = vlaneseq
    %v349 = vshrl.u32 %v348, 7
    %v350 = vsub.s32 0, %v349
    %v351 = vrot.slane %v346, %v350
    %v357 = vunpack.c.l.b16 %v342
    %v358 = vunpack.c.l.b16 %v343
    %v359 = vunpack.c.l.b16 %v344
    %v360 = vunpack.c.l.b16 %v345
    %v361 = vpack.c.b16 %v358, %v357
    %v362 = vpack.c.b16 %v360, %v359
    %v366 = vsel %vm284, %v341, 0
    %368 = vmatprep.subr.bf16.mxu0 0
    %369 = vmatpush1.bf16.msra.mxu0 %v361
    %370 = vmatprep.subr.bf16.mxu0 0
    %371 = vmatpush1.bf16.msra.mxu0 %v362
    %372 = vmatprep.subr.bf16.mxu0 0
    %373 = vmatpush1.bf16.msra.mxu0 0
    %374 = vmatprep.subr.bf16.mxu0 0
    %375 = vmatpush1.bf16.msra.mxu0 0
    %376 = vmatprep.subr.bf16.mxu0 0
    %377 = vmatpush1.bf16.msra.mxu0 0
    %378 = vmatprep.subr.bf16.mxu0 0
    %379 = vmatpush1.bf16.msra.mxu0 0
    %380 = vmatprep.subr.bf16.mxu0 0
    %381 = vmatpush1.bf16.msra.mxu0 0
    %382 = vmatprep.subr.bf16.mxu0 0
    %383 = vmatpush1.bf16.msra.mxu0 0
    %384 = vmatprep.subr.bf16.mxu0 0
    %385 = vmatpush1.bf16.msra.mxu0 0
    %386 = vmatprep.subr.bf16.mxu0 0
    %387 = vmatpush1.bf16.msra.mxu0 0
    %388 = vmatprep.subr.bf16.mxu0 0
    %389 = vmatpush1.bf16.msra.mxu0 0
    %390 = vmatprep.subr.bf16.mxu0 0
    %391 = vmatpush1.bf16.msra.mxu0 0
    %392 = vmatprep.subr.bf16.mxu0 0
    %393 = vmatpush1.bf16.msra.mxu0 0
    %394 = vmatprep.subr.bf16.mxu0 0
    %395 = vmatpush1.bf16.msra.mxu0 0
    %396 = vmatprep.subr.bf16.mxu0 0
    %397 = vmatpush1.bf16.msra.mxu0 0
    %398 = vmatprep.subr.bf16.mxu0 0
    %399 = vmatpush1.bf16.msra.mxu0 0
    %400 = vmatprep.mubr.bf16.mxu0 0
    %401 = vmatmul.mubr.bf16.gmra.mrb[0].mxu0 %v366
    %v402 = vpop.f32.mrb[0].mxu0
    %v403 = vadd.f32 %v351, %v402
    %v404 = vpop.f32.mrb[0].mxu0
    %v405 = vpop.f32.mrb[0].mxu0
    %v406 = vadd.f32 %v351, %v405
    %v407 = vpop.f32.mrb[0].mxu0
    %408 = vdwg.mxu0
    %vm409 = vcmp.gt.f32.partialorder %v403, 0.0
    %vm410 = vcmp.gt.f32.partialorder %v406, 0.0
    %v411 = vmul.f32 %v403, 1.442695
    %v412 = vpow.pop %v411
    %v413 = vmul.f32 %v406, 1.442695
    %v414 = vpow.pop %v413
    %v415 = vsub.f32 %v412, 1.0
    %v416 = vsub.f32 %v414, 1.0
    %v417 = vmul.f32 %v415, 1.6732632
    %v418 = vmul.f32 %v416, 1.6732632
    %v419 = vsel %vm409, %v403, %v417
    %v420 = vsel %vm410, %v406, %v418
    %v421 = vpack.c.bf16 %v420, %v419
    %v422 = vld [vmem:[%s9] sm:$0xf]
    %v423 = vld [vmem:[%s9 + $0x4] sm:$0xf]
    %v424 = vld [vmem:[%s9 + $0x8] sm:$0xf]
    %v425 = vld [vmem:[%s9 + $0xc] sm:$0xf]
    %v426 = vld [vmem:[%s10] sm:$0x1]
    %v428 = vlaneseq
    %v429 = vshrl.u32 %v428, 7
    %v430 = vsub.s32 0, %v429
    %v431 = vrot.slane %v426, %v430
    %v437 = vunpack.c.l.b16 %v422
    %v438 = vunpack.c.l.b16 %v423
    %v439 = vunpack.c.l.b16 %v424
    %v440 = vunpack.c.l.b16 %v425
    %v441 = vpack.c.b16 %v438, %v437
    %v442 = vpack.c.b16 %v440, %v439
    %v446 = vsel %vm284, %v421, 0
    %448 = vmatprep.subr.bf16.mxu0 0
    %449 = vmatpush1.bf16.msra.mxu0 %v441
    %450 = vmatprep.subr.bf16.mxu0 0
    %451 = vmatpush1.bf16.msra.mxu0 %v442
    %452 = vmatprep.subr.bf16.mxu0 0
    %453 = vmatpush1.bf16.msra.mxu0 0
    %454 = vmatprep.subr.bf16.mxu0 0
    %455 = vmatpush1.bf16.msra.mxu0 0
    %456 = vmatprep.subr.bf16.mxu0 0
    %457 = vmatpush1.bf16.msra.mxu0 0
    %458 = vmatprep.subr.bf16.mxu0 0
    %459 = vmatpush1.bf16.msra.mxu0 0
    %460 = vmatprep.subr.bf16.mxu0 0
    %461 = vmatpush1.bf16.msra.mxu0 0
    %462 = vmatprep.subr.bf16.mxu0 0
    %463 = vmatpush1.bf16.msra.mxu0 0
    %464 = vmatprep.subr.bf16.mxu0 0
    %465 = vmatpush1.bf16.msra.mxu0 0
    %466 = vmatprep.subr.bf16.mxu0 0
    %467 = vmatpush1.bf16.msra.mxu0 0
    %468 = vmatprep.subr.bf16.mxu0 0
    %469 = vmatpush1.bf16.msra.mxu0 0
    %470 = vmatprep.subr.bf16.mxu0 0
    %471 = vmatpush1.bf16.msra.mxu0 0
    %472 = vmatprep.subr.bf16.mxu0 0
    %473 = vmatpush1.bf16.msra.mxu0 0
    %474 = vmatprep.subr.bf16.mxu0 0
    %475 = vmatpush1.bf16.msra.mxu0 0
    %476 = vmatprep.subr.bf16.mxu0 0
    %477 = vmatpush1.bf16.msra.mxu0 0
    %478 = vmatprep.subr.bf16.mxu0 0
    %479 = vmatpush1.bf16.msra.mxu0 0
    %480 = vmatprep.mubr.bf16.mxu0 0
    %481 = vmatmul.mubr.bf16.gmra.mrb[0].mxu0 %v446
    %v482 = vpop.f32.mrb[0].mxu0
    %v483 = vadd.f32 %v431, %v482
    %v484 = vpop.f32.mrb[0].mxu0
    %v485 = vpop.f32.mrb[0].mxu0
    %v486 = vadd.f32 %v431, %v485
    %v487 = vpop.f32.mrb[0].mxu0
    %488 = vdwg.mxu0
    %489 = vst.msk [vmem:[#allocation13] sm:$0xff] %vm284, %v483
    %490 = vst.msk [vmem:[#allocation13 + $0x8] sm:$0xff] %vm284, %v486
    // Predicated region
    $region70: #{tpu_custom_call.1} parent=1 // pred_check
      _
    $region71: #{tpu_custom_call.1} parent=1 // pred_check_branch
      %492 = sbr.rel (0) target = $region73
    $region72: #{tpu_custom_call.1} parent=1 // pred_region
      %s494 = ssub.s32 256, 256
      %495 = vsyncadd [#allocation4], %s494
      %s496 = sshll.u32 [#allocation13], 4
      %s497 = int_to_ptr.vmem [resolvable:$true] %s496
      %502 = dma.vmem_to_hbm [thread:$0]  %s497, 256, %s11, [#allocation4], 128, 128, 8
    $region73: #{tpu_custom_call.1} parent=1 // pred_fallthru
      _
    // Predicated region
    $region74: #{tpu_custom_call.1} parent=1 // pred_check
      _
    $region75: #{tpu_custom_call.1} parent=1 // pred_check_branch
      %504 = sbr.rel (0) target = $region77
    $region76: #{tpu_custom_call.1} parent=1 // pred_region
      %505 = dma.done [#allocation4], 256
    $region77: #{tpu_custom_call.1} parent=1 // pred_fallthru
      _
    %506 = vsyncpa [#allocation3], 1
    %507 = vsyncpa [#allocation6], 1
    %508 = vsyncpa [#allocation9], 1
    %509 = vsyncpa [#allocation12], 1
    %510 = vsyncpa [#allocation4], 1

</llo_original>
